<compile_context>
chip_gen: v6e
topology: v6e:2x2x1
jax: 0.10.0
libtpu: 0.0.40
codegen_flags: <defaults>
</compile_context>

<pallas_src>
import functools
import math

import jax
import jax.numpy as jnp
from jax.experimental import pallas as pl
from jax.experimental.pallas import tpu as pltpu


# ---------------------------------------------------------------------------
# Kernel
# ---------------------------------------------------------------------------
def make_actor_kernel(n_layers: int):
    """Pallas kernel for `n_layers` Linear layers (last one uses tanh)."""

    def kernel(*refs):
        # refs: x, scale, shift, (W_1, b_1), ..., (W_L, b_L), out
        x_ref, scale_ref, shift_ref = refs[0], refs[1], refs[2]
        out_ref = refs[-1]
        layer_refs = refs[3:-1]

        # Fused BatchNorm apply: one FMA per element (f32, VPU).
        h = x_ref[...] * scale_ref[...] + shift_ref[...]

        for i in range(n_layers):
            w = layer_refs[2 * i][...]        # bf16 (hidden) / f32 (output)
            b = layer_refs[2 * i + 1][...]    # f32 bias
            acc = jnp.dot(h.astype(w.dtype), w,
                          preferred_element_type=jnp.float32) + b
            if i < n_layers - 1:
                h = jnp.maximum(acc, 0.0)     # ReLU (f32, VPU)
            else:
                out_ref[...] = jnp.tanh(acc)  # tanh -> EUP; lane-dense f32 store

    return kernel


# ---------------------------------------------------------------------------
# Parameter packing (ONE-TIME: pad feature dims, cast hidden weights to bf16)
# ---------------------------------------------------------------------------
def _round_up(n: int, m: int) -> int:
    return ((n + m - 1) // m) * m


def _pad2d(x, rows: int, cols: int):
    r, c = x.shape
    if rows == r and cols == c:
        return x
    return jnp.pad(x, ((0, rows - r), (0, cols - c)))


def pack_actor_params(params):
    """Pre-pack params for the kernel: pad N/K to 128, cast hidden W to bf16.

    Done once, outside the per-call jitted forward, so no per-call pad/cast
    pass over the weights.
    """
    state_size = params["gamma"].shape[1]
    layers = []
    prev = state_size                       # first layer keeps K == state_size
    for w, b in params["hidden"]:
        n_pad = _round_up(w.shape[1], 128)
        layers.append((_pad2d(w, prev, n_pad).astype(jnp.bfloat16),
                       _pad2d(b, 1, n_pad).astype(jnp.float32)))
        prev = n_pad
    action_size = params["w_out"].shape[1]
    a_pad = _round_up(action_size, 128)
    # Final layer stays f32 (tiny matmul; tighter accuracy at negligible cost).
    layers.append((_pad2d(params["w_out"], prev, a_pad).astype(jnp.float32),
                   _pad2d(params["b_out"], 1, a_pad).astype(jnp.float32)))
    packed = {
        "gamma": params["gamma"].astype(jnp.float32),
        "beta": params["beta"].astype(jnp.float32),
        "layers": layers,
    }
    return packed, action_size


# ---------------------------------------------------------------------------
# Wrapper
# ---------------------------------------------------------------------------
def _choose_batch_tile(batch: int, block_batch: int) -> int:
    """Batch tile: multiple of 8, <= block_batch, and >=2 grid tiles when
    batch > 8 so v7x's two TensorCores both get work."""
    if batch <= 8:
        return _round_up(max(batch, 1), 8)
    half = _round_up(-(-batch // 2), 8)
    return max(8, min(block_batch, half))


@functools.partial(jax.jit, static_argnames=("action_size", "block_batch"))
def actor_forward(state, packed, *, action_size: int, block_batch: int = 512):
    """Actor forward pass.  state: [batch, state_size] f32."""
    eps = 1e-5
    batch, state_size = state.shape
    layers = packed["layers"]
    n_layers = len(layers)
    a_pad = layers[-1][0].shape[1]

    # --- BatchNorm1d batch statistics over the FULL (unpadded) batch,
    #     fused into a single scale/shift pair (training-mode semantics). ---
    x = state.astype(jnp.float32)
    mean = jnp.mean(x, axis=0, keepdims=True)
    var = jnp.mean(jnp.square(x - mean), axis=0, keepdims=True)
    inv = jax.lax.rsqrt(var + eps)
    scale = packed["gamma"] * inv              # [1, S]
    shift = packed["beta"] - mean * scale      # [1, S]

    # --- batch tiling (no feature padding of activations) ---
    tb = _choose_batch_tile(batch, block_batch)
    b_pad = _round_up(batch, tb)
    if b_pad != batch:
        x = jnp.pad(x, ((0, b_pad - batch), (0, 0)))

    args = [x, scale, shift]
    in_specs = [
        pl.BlockSpec((tb, state_size), lambda i: (i, 0)),   # x: tiled over batch
        pl.BlockSpec((1, state_size), lambda i: (0, 0)),    # scale: resident
        pl.BlockSpec((1, state_size), lambda i: (0, 0)),    # shift: resident
    ]
    for w, b in layers:
        args.extend([w, b])
        in_specs.append(pl.BlockSpec(w.shape, lambda i: (0, 0)))
        in_specs.append(pl.BlockSpec(b.shape, lambda i: (0, 0)))

    # --- scoped-VMEM estimate (double-buffered tiles + resident operands);
    #     only raise the limit when we would exceed v5e's 16 MiB default. ---
    vmem_est = 2 * tb * state_size * 4 + 2 * tb * a_pad * 4
    vmem_est += 2 * 2 * state_size * 4
    for w, b in layers:
        vmem_est += 2 * (w.size * w.dtype.itemsize + b.size * b.dtype.itemsize)
        vmem_est += tb * w.shape[1] * 4        # live f32 activation per layer
    cp_kwargs = dict(dimension_semantics=("parallel",))
    if vmem_est > (12 << 20):
        cp_kwargs["vmem_limit_bytes"] = min(_round_up(2 * vmem_est, 1 << 20),
                                            100 << 20)

    out = pl.pallas_call(
        make_actor_kernel(n_layers),
        out_shape=jax.ShapeDtypeStruct((b_pad, a_pad), jnp.float32),
        grid=(pl.cdiv(b_pad, tb),),
        in_specs=in_specs,
        out_specs=pl.BlockSpec((tb, a_pad), lambda i: (i, 0)),
        compiler_params=pltpu.CompilerParams(**cp_kwargs),
    )(*args)

    return out[:batch, :action_size]


# ---------------------------------------------------------------------------
# Parameter init (mirrors the PyTorch module's shapes / init ranges)
# ---------------------------------------------------------------------------
def init_actor_params(key, state_size, hidden_units, action_size):
    params = {
        "gamma": jnp.ones((1, state_size), jnp.float32),   # BN affine defaults
        "beta": jnp.zeros((1, state_size), jnp.float32),
        "hidden": [],
    }
    units = [state_size, *hidden_units]
    for i in range(1, len(units)):
        fan_in, fan_out = units[i - 1], units[i]
        key, kw, kb = jax.random.split(key, 3)
        # hidden_init uses weight.size()[0] == out_features in the PyTorch code.
        lim = 1.0 / math.sqrt(fan_out)
        w = jax.random.uniform(kw, (fan_in, fan_out), jnp.float32, -lim, lim)
        blim = 1.0 / math.sqrt(fan_in)
        b = jax.random.uniform(kb, (1, fan_out), jnp.float32, -blim, blim)
        params["hidden"].append((w, b))

    key, kw, kb = jax.random.split(key, 3)
    w_out = jax.random.uniform(kw, (units[-1], action_size), jnp.float32, -3e-3, 3e-3)
    blim = 1.0 / math.sqrt(units[-1])
    b_out = jax.random.uniform(kb, (1, action_size), jnp.float32, -blim, blim)
    params["w_out"] = w_out
    params["b_out"] = b_out
    return params


def actor_forward_ref(state, params, eps=1e-5):
    """Pure-JAX f32 reference of the same forward pass."""
    x = state.astype(jnp.float32)
    mean = jnp.mean(x, axis=0, keepdims=True)
    var = jnp.mean((x - mean) ** 2, axis=0, keepdims=True)
    x = (x - mean) / jnp.sqrt(var + eps) * params["gamma"] + params["beta"]
    for w, b in params["hidden"]:
        x = jax.nn.relu(x @ w + b)
    return jnp.tanh(x @ params["w_out"] + params["b_out"])


if __name__ == "__main__":
    batch = 20            # non-multiple of 8 -> exercises batch padding
    state_size = 16
    hidden_units = [64, 32]
    action_size = 4

    key = jax.random.PRNGKey(0)
    key, kx = jax.random.split(key)
    state = jax.random.normal(kx, (batch, state_size), jnp.float32)
    params = init_actor_params(key, state_size, hidden_units, action_size)

    # One-time packing: pad feature dims to 128, hidden weights -> bf16.
    packed, a_size = pack_actor_params(params)

    # batch=20 -> tb=16, two batch tiles -> multi-step "parallel" grid.
    out = actor_forward(state, packed, action_size=a_size)
    out = jax.block_until_ready(out)

    ref = actor_forward_ref(state, params)
    assert out.shape == (batch, action_size)
    # bf16 MXU operands in the hidden layers (f32 accumulation, f32 final
    # layer) -> loosened tolerance vs the all-f32 reference.
    assert jnp.allclose(out, ref, atol=2e-2, rtol=2e-2), "mismatch vs reference"

    print("KERNEL_OK")
</pallas_src>

<mosaic_0001>
module attributes {stable_mosaic.version = 11 : i64} {
  func.func @kernel(%arg0: i32, %arg1: memref<16x16xf32, #tpu.memory_space<vmem>>, %arg2: memref<1x16xf32, #tpu.memory_space<vmem>>, %arg3: memref<1x16xf32, #tpu.memory_space<vmem>>, %arg4: memref<16x128xbf16, #tpu.memory_space<vmem>>, %arg5: memref<1x128xf32, #tpu.memory_space<vmem>>, %arg6: memref<128x128xbf16, #tpu.memory_space<vmem>>, %arg7: memref<1x128xf32, #tpu.memory_space<vmem>>, %arg8: memref<128x128xf32, #tpu.memory_space<vmem>>, %arg9: memref<1x128xf32, #tpu.memory_space<vmem>>, %arg10: memref<16x128xf32, #tpu.memory_space<vmem>>) attributes {dimension_semantics = [#tpu.dimension_semantics<parallel>], iteration_bounds = array<i64: 2>, scalar_prefetch = 0 : i64, scratch_operands = 0 : i64, tpu.core_type = #tpu.core_type<tc>, window_params = [{transform_indices = @transform_0, window_bounds = array<i64: 16, 16>}, {pipeline_mode = #tpu.pipeline_mode<synchronous>, transform_indices = @transform_1, window_bounds = array<i64: 1, 16>}, {pipeline_mode = #tpu.pipeline_mode<synchronous>, transform_indices = @transform_2, window_bounds = array<i64: 1, 16>}, {pipeline_mode = #tpu.pipeline_mode<synchronous>, transform_indices = @transform_3, window_bounds = array<i64: 16, 128>}, {pipeline_mode = #tpu.pipeline_mode<synchronous>, transform_indices = @transform_4, window_bounds = array<i64: 1, 128>}, {pipeline_mode = #tpu.pipeline_mode<synchronous>, transform_indices = @transform_5, window_bounds = array<i64: 128, 128>}, {pipeline_mode = #tpu.pipeline_mode<synchronous>, transform_indices = @transform_6, window_bounds = array<i64: 1, 128>}, {pipeline_mode = #tpu.pipeline_mode<synchronous>, transform_indices = @transform_7, window_bounds = array<i64: 128, 128>}, {pipeline_mode = #tpu.pipeline_mode<synchronous>, transform_indices = @transform_8, window_bounds = array<i64: 1, 128>}, {transform_indices = @transform_9, window_bounds = array<i64: 16, 128>}]} {
    %c0 = arith.constant 0 : index
    %c0_0 = arith.constant 0 : index
    %0 = vector.load %arg1[%c0, %c0_0] : memref<16x16xf32, #tpu.memory_space<vmem>>, vector<16x16xf32>
    %c0_1 = arith.constant 0 : index
    %c0_2 = arith.constant 0 : index
    %1 = vector.load %arg2[%c0_1, %c0_2] : memref<1x16xf32, #tpu.memory_space<vmem>>, vector<1x16xf32>
    %2 = vector.broadcast %1 : vector<1x16xf32> to vector<16x16xf32>
    %3 = arith.mulf %0, %2 : vector<16x16xf32>
    %c0_3 = arith.constant 0 : index
    %c0_4 = arith.constant 0 : index
    %4 = vector.load %arg3[%c0_3, %c0_4] : memref<1x16xf32, #tpu.memory_space<vmem>>, vector<1x16xf32>
    %5 = vector.broadcast %4 : vector<1x16xf32> to vector<16x16xf32>
    %6 = arith.addf %3, %5 : vector<16x16xf32>
    %c0_5 = arith.constant 0 : index
    %c0_6 = arith.constant 0 : index
    %7 = vector.load %arg4[%c0_5, %c0_6] : memref<16x128xbf16, #tpu.memory_space<vmem>>, vector<16x128xbf16>
    %c0_7 = arith.constant 0 : index
    %c0_8 = arith.constant 0 : index
    %8 = vector.load %arg5[%c0_7, %c0_8] : memref<1x128xf32, #tpu.memory_space<vmem>>, vector<1x128xf32>
    %9 = arith.truncf %6 : vector<16x16xf32> to vector<16x16xbf16>
    %cst = arith.constant dense<0.000000e+00> : vector<16x128xf32>
    %10 = tpu.matmul %9, %7, %cst {dimension_numbers = #tpu.dot_dimension_numbers<[1], [0], [0], [1], [0, 0, 1, 1], [], []>} : vector<16x16xbf16>, vector<16x128xbf16>, vector<16x128xf32> -> vector<16x128xf32>
    %11 = vector.broadcast %8 : vector<1x128xf32> to vector<16x128xf32>
    %12 = arith.addf %10, %11 : vector<16x128xf32>
    %cst_9 = arith.constant 0.000000e+00 : f32
    %13 = vector.broadcast %cst_9 : f32 to vector<16x128xf32>
    %14 = arith.maximumf %12, %13 : vector<16x128xf32>
    %c0_10 = arith.constant 0 : index
    %c0_11 = arith.constant 0 : index
    %15 = vector.load %arg6[%c0_10, %c0_11] : memref<128x128xbf16, #tpu.memory_space<vmem>>, vector<128x128xbf16>
    %c0_12 = arith.constant 0 : index
    %c0_13 = arith.constant 0 : index
    %16 = vector.load %arg7[%c0_12, %c0_13] : memref<1x128xf32, #tpu.memory_space<vmem>>, vector<1x128xf32>
    %17 = arith.truncf %14 : vector<16x128xf32> to vector<16x128xbf16>
    %cst_14 = arith.constant dense<0.000000e+00> : vector<16x128xf32>
    %18 = tpu.matmul %17, %15, %cst_14 {dimension_numbers = #tpu.dot_dimension_numbers<[1], [0], [0], [1], [0, 0, 1, 1], [], []>} : vector<16x128xbf16>, vector<128x128xbf16>, vector<16x128xf32> -> vector<16x128xf32>
    %19 = vector.broadcast %16 : vector<1x128xf32> to vector<16x128xf32>
    %20 = arith.addf %18, %19 : vector<16x128xf32>
    %cst_15 = arith.constant 0.000000e+00 : f32
    %21 = vector.broadcast %cst_15 : f32 to vector<16x128xf32>
    %22 = arith.maximumf %20, %21 : vector<16x128xf32>
    %c0_16 = arith.constant 0 : index
    %c0_17 = arith.constant 0 : index
    %23 = vector.load %arg8[%c0_16, %c0_17] : memref<128x128xf32, #tpu.memory_space<vmem>>, vector<128x128xf32>
    %c0_18 = arith.constant 0 : index
    %c0_19 = arith.constant 0 : index
    %24 = vector.load %arg9[%c0_18, %c0_19] : memref<1x128xf32, #tpu.memory_space<vmem>>, vector<1x128xf32>
    %cst_20 = arith.constant dense<0.000000e+00> : vector<16x128xf32>
    %25 = tpu.matmul %22, %23, %cst_20 {dimension_numbers = #tpu.dot_dimension_numbers<[1], [0], [0], [1], [0, 0, 1, 1], [], []>} : vector<16x128xf32>, vector<128x128xf32>, vector<16x128xf32> -> vector<16x128xf32>
    %26 = vector.broadcast %24 : vector<1x128xf32> to vector<16x128xf32>
    %27 = arith.addf %25, %26 : vector<16x128xf32>
    %28 = math.tanh %27 : vector<16x128xf32>
    %c0_21 = arith.constant 0 : index
    %c0_22 = arith.constant 0 : index
    %29 = vector.load %arg10[%c0_21, %c0_22] : memref<16x128xf32, #tpu.memory_space<vmem>>, vector<16x128xf32>
    tpu.vector_store %arg10[%c0_21, %c0_22], %28 {strides = array<i32>} : memref<16x128xf32, #tpu.memory_space<vmem>>, vector<16x128xf32>,
    return
  }
  func.func @transform_0(%arg0: i32) -> (i32, i32) {
    %c0_i32 = arith.constant 0 : i32
    %c0_i32_0 = arith.constant 0 : i32
    return %arg0, %c0_i32 : i32, i32
  }
  func.func @transform_1(%arg0: i32) -> (i32, i32) {
    %c0_i32 = arith.constant 0 : i32
    %c0_i32_0 = arith.constant 0 : i32
    %c0_i32_1 = arith.constant 0 : i32
    return %c0_i32, %c0_i32_0 : i32, i32
  }
  func.func @transform_2(%arg0: i32) -> (i32, i32) {
    %c0_i32 = arith.constant 0 : i32
    %c0_i32_0 = arith.constant 0 : i32
    %c0_i32_1 = arith.constant 0 : i32
    return %c0_i32, %c0_i32_0 : i32, i32
  }
  func.func @transform_3(%arg0: i32) -> (i32, i32) {
    %c0_i32 = arith.constant 0 : i32
    %c0_i32_0 = arith.constant 0 : i32
    %c0_i32_1 = arith.constant 0 : i32
    return %c0_i32, %c0_i32_0 : i32, i32
  }
  func.func @transform_4(%arg0: i32) -> (i32, i32) {
    %c0_i32 = arith.constant 0 : i32
    %c0_i32_0 = arith.constant 0 : i32
    %c0_i32_1 = arith.constant 0 : i32
    return %c0_i32, %c0_i32_0 : i32, i32
  }
  func.func @transform_5(%arg0: i32) -> (i32, i32) {
    %c0_i32 = arith.constant 0 : i32
    %c0_i32_0 = arith.constant 0 : i32
    %c0_i32_1 = arith.constant 0 : i32
    return %c0_i32, %c0_i32_0 : i32, i32
  }
  func.func @transform_6(%arg0: i32) -> (i32, i32) {
    %c0_i32 = arith.constant 0 : i32
    %c0_i32_0 = arith.constant 0 : i32
    %c0_i32_1 = arith.constant 0 : i32
    return %c0_i32, %c0_i32_0 : i32, i32
  }
  func.func @transform_7(%arg0: i32) -> (i32, i32) {
    %c0_i32 = arith.constant 0 : i32
    %c0_i32_0 = arith.constant 0 : i32
    %c0_i32_1 = arith.constant 0 : i32
    return %c0_i32, %c0_i32_0 : i32, i32
  }
  func.func @transform_8(%arg0: i32) -> (i32, i32) {
    %c0_i32 = arith.constant 0 : i32
    %c0_i32_0 = arith.constant 0 : i32
    %c0_i32_1 = arith.constant 0 : i32
    return %c0_i32, %c0_i32_0 : i32, i32
  }
  func.func @transform_9(%arg0: i32) -> (i32, i32) {
    %c0_i32 = arith.constant 0 : i32
    %c0_i32_0 = arith.constant 0 : i32
    return %arg0, %c0_i32 : i32, i32
  }
}

</mosaic_0001>

<llo_original>
// kernel: actor_forward.1
$region0: #{actor_forward.1}
  #allocation0 [shape = 'u32[]', space=smem, size = 0x4, offset = 0x4, fixed_abs, tag = 'smem constant byte address 0x4 - core index']
  #allocation1 [shape = 'u32[144,128]{1,0:T(1,128)}', space=vmem, size = 0x12000, scoped, tag = 'internal scratch']
  %s0 = inlined_call_operand.vmem [shape: f32[32,16], index: 0, kind: input, shape index: {}]
  %s1 = inlined_call_operand.vmem [shape: f32[1,16], index: 1, kind: input, shape index: {}]
  %s2 = inlined_call_operand.vmem [shape: f32[1,16], index: 2, kind: input, shape index: {}]
  %s3 = inlined_call_operand.vmem [shape: bf16[16,128], index: 3, kind: input, shape index: {}]
  %s4 = inlined_call_operand.vmem [shape: f32[1,128], index: 4, kind: input, shape index: {}]
  %s5 = inlined_call_operand.hbm [shape: bf16[128,128], index: 5, kind: input, shape index: {}]
  %s6 = inlined_call_operand.vmem [shape: f32[1,128], index: 6, kind: input, shape index: {}]
  %s7 = inlined_call_operand.vmem [shape: f32[128,128], index: 7, kind: input, shape index: {}]
  %s8 = inlined_call_operand.vmem [shape: f32[1,128], index: 8, kind: input, shape index: {}]
  %s9 = inlined_call_operand.vmem [shape: f32[32,128], index: 9, kind: output, shape index: {}]
  %s10 = sld [smem:[#allocation0]]
  $region73: #{actor_forward.1} parent=0
    _
  %s12 = ssub.s32 1, %s10
  %s13 = scalar_select 0, %s12, %s10
  $region1: #{actor_forward.1} parent=0
    #allocation2 [shape = 'u8[32768]{0}', space=vmem, size = 0x8000, scoped, tag = 'input window, operand 5, single buffered']
    #allocation3 [shape = 's32[2]{0}', space=sflag, size = 0x8, scoped, tag = 'scoped memory for actor_forward.1']
    %14 = vsyncpa [#allocation3], 0
    loop: start=0, step=1, limit=4
    $region2: #{actor_forward.1} parent=1 // loop_pre_header
      _
    $region3: #{actor_forward.1} parent=1 // loop_header
      %s16 = sphi 0, %s20
      %p17 = scmp.ge.s32.totalorder %s16, 4
      %s26 = sphi 0, %s28
      %s29 = sphi 0, %s26
      %s30 = sphi 0, %s29
      %s46 = sphi 0, %s30
      %s50 = sphi 0, %s50
      %s52 = sphi 0, %s50
      %s53 = sphi 0, %s52
      %s67 = sphi 0, %s53
      %s71 = sphi 0, %s71
      %s73 = sphi 0, %s71
      %s74 = sphi 0, %s73
      %s88 = sphi 0, %s74
      %s92 = sphi 0, %s92
      %s94 = sphi 0, %s92
      %s95 = sphi 0, %s94
      %s109 = sphi 0, %s95
      %s113 = sphi 0, %s113
      %s115 = sphi 0, %s113
      %s116 = sphi 0, %s115
      %s130 = sphi 0, %s116
      %s134 = sphi 0, %s134
      %s136 = sphi 0, %s134
      %s137 = sphi 0, %s136
      %s151 = sphi 0, %s137
      %s155 = sphi 0, %s155
      %s157 = sphi 0, %s155
      %s158 = sphi 0, %s157
      %s172 = sphi 0, %s158
      %s176 = sphi 0, %s176
      %s178 = sphi 0, %s176
      %s179 = sphi 0, %s178
      %s193 = sphi 0, %s179
      %s197 = sphi 0, %s197
      %s199 = sphi 0, %s197
      %s200 = sphi 0, %s199
      %s214 = sphi 0, %s200
      %s220 = sphi 0, %s222
      %s223 = sphi 0, %s220
      %s224 = sphi 0, %s223
      %s240 = sphi 0, %s224
    $region4: #{actor_forward.1} parent=1 // loop_header_branch
      %19 = sbr.rel (%p17) target = $region8
    $region5: #{actor_forward.1} parent=1 // loop_body
      %s21 = ssub.s32 %s16, 1
      %s22 = ssub.s32 %s16, 2
      %s23 = sadd.s32 %s16, 1
      %s24 = ssub.s32 %s16, %s23
      %p25 = scmp.eq.s32.totalorder %s24, 0
      %s27 = sadd.s32 %s26, 1
      %s28 = scalar_select %p25, %s26, %s27
      %p31 = pneg %p25
      %p32 = scmp.eq.s32.totalorder %s16, 1
      %p33 = por %p31, %p32
      %p34 = scmp.ne.s32.totalorder %s26, %s29
      %p35 = scmp.eq.s32.totalorder %s16, 0
      %p36 = por %p34, %p35
      %p37 = scmp.ne.s32.totalorder %s26, %s29
      %p38 = scmp.eq.s32.totalorder %s21, 1
      %p39 = por %p37, %p38
      %p40 = scmp.ne.s32.totalorder %s29, %s30
      %p41 = scmp.eq.s32.totalorder %s21, 0
      %p42 = por %p40, %p41
      %p43 = scmp.ne.s32.totalorder %s29, %s30
      %p44 = scmp.eq.s32.totalorder %s22, 1
      %p45 = por %p43, %p44
      %p47 = scmp.ne.s32.totalorder %s30, %s46
      %p48 = scmp.eq.s32.totalorder %s22, 0
      %p49 = por %p47, %p48
      %s51 = sadd.s32 %s50, 1
      %p54 = scmp.eq.s32.totalorder %s16, 1
      %p55 = scmp.ne.s32.totalorder %s50, %s52
      %p56 = scmp.eq.s32.totalorder %s16, 0
      %p57 = por %p55, %p56
      %p58 = scmp.ne.s32.totalorder %s50, %s52
      %p59 = scmp.eq.s32.totalorder %s21, 1
      %p60 = por %p58, %p59
      %p61 = scmp.ne.s32.totalorder %s52, %s53
      %p62 = scmp.eq.s32.totalorder %s21, 0
      %p63 = por %p61, %p62
      %p64 = scmp.ne.s32.totalorder %s52, %s53
      %p65 = scmp.eq.s32.totalorder %s22, 1
      %p66 = por %p64, %p65
      %p68 = scmp.ne.s32.totalorder %s53, %s67
      %p69 = scmp.eq.s32.totalorder %s22, 0
      %p70 = por %p68, %p69
      %s72 = sadd.s32 %s71, 1
      %p75 = scmp.eq.s32.totalorder %s16, 1
      %p76 = scmp.ne.s32.totalorder %s71, %s73
      %p77 = scmp.eq.s32.totalorder %s16, 0
      %p78 = por %p76, %p77
      %p79 = scmp.ne.s32.totalorder %s71, %s73
      %p80 = scmp.eq.s32.totalorder %s21, 1
      %p81 = por %p79, %p80
      %p82 = scmp.ne.s32.totalorder %s73, %s74
      %p83 = scmp.eq.s32.totalorder %s21, 0
      %p84 = por %p82, %p83
      %p85 = scmp.ne.s32.totalorder %s73, %s74
      %p86 = scmp.eq.s32.totalorder %s22, 1
      %p87 = por %p85, %p86
      %p89 = scmp.ne.s32.totalorder %s74, %s88
      %p90 = scmp.eq.s32.totalorder %s22, 0
      %p91 = por %p89, %p90
      %s93 = sadd.s32 %s92, 1
      %p96 = scmp.eq.s32.totalorder %s16, 1
      %p97 = scmp.ne.s32.totalorder %s92, %s94
      %p98 = scmp.eq.s32.totalorder %s16, 0
      %p99 = por %p97, %p98
      %p100 = scmp.ne.s32.totalorder %s92, %s94
      %p101 = scmp.eq.s32.totalorder %s21, 1
      %p102 = por %p100, %p101
      %p103 = scmp.ne.s32.totalorder %s94, %s95
      %p104 = scmp.eq.s32.totalorder %s21, 0
      %p105 = por %p103, %p104
      %p106 = scmp.ne.s32.totalorder %s94, %s95
      %p107 = scmp.eq.s32.totalorder %s22, 1
      %p108 = por %p106, %p107
      %p110 = scmp.ne.s32.totalorder %s95, %s109
      %p111 = scmp.eq.s32.totalorder %s22, 0
      %p112 = por %p110, %p111
      %s114 = sadd.s32 %s113, 1
      %p117 = scmp.eq.s32.totalorder %s16, 1
      %p118 = scmp.ne.s32.totalorder %s113, %s115
      %p119 = scmp.eq.s32.totalorder %s16, 0
      %p120 = por %p118, %p119
      %p121 = scmp.ne.s32.totalorder %s113, %s115
      %p122 = scmp.eq.s32.totalorder %s21, 1
      %p123 = por %p121, %p122
      %p124 = scmp.ne.s32.totalorder %s115, %s116
      %p125 = scmp.eq.s32.totalorder %s21, 0
      %p126 = por %p124, %p125
      %p127 = scmp.ne.s32.totalorder %s115, %s116
      %p128 = scmp.eq.s32.totalorder %s22, 1
      %p129 = por %p127, %p128
      %p131 = scmp.ne.s32.totalorder %s116, %s130
      %p132 = scmp.eq.s32.totalorder %s22, 0
      %p133 = por %p131, %p132
      %s135 = sadd.s32 %s134, 1
      %p138 = scmp.eq.s32.totalorder %s16, 1
      %p139 = scmp.ne.s32.totalorder %s134, %s136
      %p140 = scmp.eq.s32.totalorder %s16, 0
      %p141 = por %p139, %p140
      %p142 = scmp.ne.s32.totalorder %s134, %s136
      %p143 = scmp.eq.s32.totalorder %s21, 1
      %p144 = por %p142, %p143
      %p145 = scmp.ne.s32.totalorder %s136, %s137
      %p146 = scmp.eq.s32.totalorder %s21, 0
      %p147 = por %p145, %p146
      %p148 = scmp.ne.s32.totalorder %s136, %s137
      %p149 = scmp.eq.s32.totalorder %s22, 1
      %p150 = por %p148, %p149
      %p152 = scmp.ne.s32.totalorder %s137, %s151
      %p153 = scmp.eq.s32.totalorder %s22, 0
      %p154 = por %p152, %p153
      %s156 = sadd.s32 %s155, 1
      %p159 = scmp.eq.s32.totalorder %s16, 1
      %p160 = scmp.ne.s32.totalorder %s155, %s157
      %p161 = scmp.eq.s32.totalorder %s16, 0
      %p162 = por %p160, %p161
      %p163 = scmp.ne.s32.totalorder %s155, %s157
      %p164 = scmp.eq.s32.totalorder %s21, 1
      %p165 = por %p163, %p164
      %p166 = scmp.ne.s32.totalorder %s157, %s158
      %p167 = scmp.eq.s32.totalorder %s21, 0
      %p168 = por %p166, %p167
      %p169 = scmp.ne.s32.totalorder %s157, %s158
      %p170 = scmp.eq.s32.totalorder %s22, 1
      %p171 = por %p169, %p170
      %p173 = scmp.ne.s32.totalorder %s158, %s172
      %p174 = scmp.eq.s32.totalorder %s22, 0
      %p175 = por %p173, %p174
      %s177 = sadd.s32 %s176, 1
      %p180 = scmp.eq.s32.totalorder %s16, 1
      %p181 = scmp.ne.s32.totalorder %s176, %s178
      %p182 = scmp.eq.s32.totalorder %s16, 0
      %p183 = por %p181, %p182
      %p184 = scmp.ne.s32.totalorder %s176, %s178
      %p185 = scmp.eq.s32.totalorder %s21, 1
      %p186 = por %p184, %p185
      %p187 = scmp.ne.s32.totalorder %s178, %s179
      %p188 = scmp.eq.s32.totalorder %s21, 0
      %p189 = por %p187, %p188
      %p190 = scmp.ne.s32.totalorder %s178, %s179
      %p191 = scmp.eq.s32.totalorder %s22, 1
      %p192 = por %p190, %p191
      %p194 = scmp.ne.s32.totalorder %s179, %s193
      %p195 = scmp.eq.s32.totalorder %s22, 0
      %p196 = por %p194, %p195
      %s198 = sadd.s32 %s197, 1
      %p201 = scmp.eq.s32.totalorder %s16, 1
      %p202 = scmp.ne.s32.totalorder %s197, %s199
      %p203 = scmp.eq.s32.totalorder %s16, 0
      %p204 = por %p202, %p203
      %p205 = scmp.ne.s32.totalorder %s197, %s199
      %p206 = scmp.eq.s32.totalorder %s21, 1
      %p207 = por %p205, %p206
      %p208 = scmp.ne.s32.totalorder %s199, %s200
      %p209 = scmp.eq.s32.totalorder %s21, 0
      %p210 = por %p208, %p209
      %p211 = scmp.ne.s32.totalorder %s199, %s200
      %p212 = scmp.eq.s32.totalorder %s22, 1
      %p213 = por %p211, %p212
      %p215 = scmp.ne.s32.totalorder %s200, %s214
      %p216 = scmp.eq.s32.totalorder %s22, 0
      %p217 = por %p215, %p216
      %s218 = ssub.s32 %s16, %s23
      %p219 = scmp.eq.s32.totalorder %s218, 0
      %s221 = sadd.s32 %s220, 1
      %s222 = scalar_select %p219, %s220, %s221
      %p225 = pneg %p219
      %p226 = scmp.eq.s32.totalorder %s16, 1
      %p227 = por %p225, %p226
      %p228 = scmp.ne.s32.totalorder %s220, %s223
      %p229 = scmp.eq.s32.totalorder %s16, 0
      %p230 = por %p228, %p229
      %p231 = scmp.ne.s32.totalorder %s220, %s223
      %p232 = scmp.eq.s32.totalorder %s21, 1
      %p233 = por %p231, %p232
      %p234 = scmp.ne.s32.totalorder %s223, %s224
      %p235 = scmp.eq.s32.totalorder %s21, 0
      %p236 = por %p234, %p235
      %p237 = scmp.ne.s32.totalorder %s223, %s224
      %p238 = scmp.eq.s32.totalorder %s22, 1
      %p239 = por %p237, %p238
      %p241 = scmp.ne.s32.totalorder %s224, %s240
      %p242 = scmp.eq.s32.totalorder %s22, 0
      %p243 = por %p241, %p242
      %p244 = scmp.le.s32.totalorder 1, %s16
      %p245 = scmp.lt.s32.totalorder %s16, 3
      %p246 = pnand %p244, %p245
      %p247 = pneg %p246
      // Predicated region
      $region9: #{actor_forward.1} parent=5 // pred_check
        _
      $region10: #{actor_forward.1} parent=5 // pred_check_branch
        %249 = sbr.rel (%p246) target = $region12
      $region11: #{actor_forward.1} parent=5 // pred_region
        %s250 = ssub.s32 %s16, 1
        // Predicated region
        $region13: #{actor_forward.1} parent=11 // pred_check
          %p251 = pneg %p63
        $region14: #{actor_forward.1} parent=11 // pred_check_branch
          %253 = sbr.rel (%p251) target = $region16
        $region15: #{actor_forward.1} parent=11 // pred_region
          _
        $region16: #{actor_forward.1} parent=11 // pred_fallthru
          _
        // Predicated region
        $region17: #{actor_forward.1} parent=11 // pred_check
          %p254 = pneg %p84
        $region18: #{actor_forward.1} parent=11 // pred_check_branch
          %256 = sbr.rel (%p254) target = $region20
        $region19: #{actor_forward.1} parent=11 // pred_region
          _
        $region20: #{actor_forward.1} parent=11 // pred_fallthru
          _
        // Predicated region
        $region21: #{actor_forward.1} parent=11 // pred_check
          %p257 = pneg %p105
        $region22: #{actor_forward.1} parent=11 // pred_check_branch
          %259 = sbr.rel (%p257) target = $region24
        $region23: #{actor_forward.1} parent=11 // pred_region
          _
        $region24: #{actor_forward.1} parent=11 // pred_fallthru
          _
        // Predicated region
        $region25: #{actor_forward.1} parent=11 // pred_check
          %p260 = pneg %p126
        $region26: #{actor_forward.1} parent=11 // pred_check_branch
          %262 = sbr.rel (%p260) target = $region28
        $region27: #{actor_forward.1} parent=11 // pred_region
          _
        $region28: #{actor_forward.1} parent=11 // pred_fallthru
          _
        // Predicated region
        $region29: #{actor_forward.1} parent=11 // pred_check
          %p263 = pneg %p147
        $region30: #{actor_forward.1} parent=11 // pred_check_branch
          %265 = sbr.rel (%p263) target = $region32
        $region31: #{actor_forward.1} parent=11 // pred_region
          %s267 = ssub.s32 1024, 1024
          %268 = vsyncadd [#allocation3], %s267
          %s269 = sshll.u32 [#allocation2], 4
          %s270 = int_to_ptr.vmem [resolvable:$true] %s269
          %275 = dma.hbm_to_vmem [thread:$0]  %s5, 1024, %s270, [#allocation3], 64, 64, 4
        $region32: #{actor_forward.1} parent=11 // pred_fallthru
          _
        // Predicated region
        $region33: #{actor_forward.1} parent=11 // pred_check
          %p276 = pneg %p168
        $region34: #{actor_forward.1} parent=11 // pred_check_branch
          %278 = sbr.rel (%p276) target = $region36
        $region35: #{actor_forward.1} parent=11 // pred_region
          _
        $region36: #{actor_forward.1} parent=11 // pred_fallthru
          _
        // Predicated region
        $region37: #{actor_forward.1} parent=11 // pred_check
          %p279 = pneg %p189
        $region38: #{actor_forward.1} parent=11 // pred_check_branch
          %281 = sbr.rel (%p279) target = $region40
        $region39: #{actor_forward.1} parent=11 // pred_region
          _
        $region40: #{actor_forward.1} parent=11 // pred_fallthru
          _
        // Predicated region
        $region41: #{actor_forward.1} parent=11 // pred_check
          %p282 = pneg %p210
        $region42: #{actor_forward.1} parent=11 // pred_check_branch
          %284 = sbr.rel (%p282) target = $region44
        $region43: #{actor_forward.1} parent=11 // pred_region
          _
        $region44: #{actor_forward.1} parent=11 // pred_fallthru
          _
      $region12: #{actor_forward.1} parent=5 // pred_fallthru
        _
      %p285 = scmp.lt.s32.totalorder %s16, 2
      // Predicated region
      $region45: #{actor_forward.1} parent=5 // pred_check
        %p286 = pneg %p285
      $region46: #{actor_forward.1} parent=5 // pred_check_branch
        %288 = sbr.rel (%p286) target = $region48
      $region47: #{actor_forward.1} parent=5 // pred_region
        // Predicated region
        $region49: #{actor_forward.1} parent=47 // pred_check
          %p289 = pneg %p36
        $region50: #{actor_forward.1} parent=47 // pred_check_branch
          %291 = sbr.rel (%p289) target = $region52
        $region51: #{actor_forward.1} parent=47 // pred_region
          %s292 = smul.u32 2, %s16
          %p293 = scmp.lt.s32.totalorder %s292, 3
          %s294 = scalar_select %p293, %s292, 3
          %s295 = smul.addr %s294, 8
          %s296 = scalar_lea.vmem %s0, %s295
          %s297 = smul.u32 2, %s16
        $region52: #{actor_forward.1} parent=47 // pred_fallthru
          _
      $region48: #{actor_forward.1} parent=5 // pred_fallthru
        _
      %p298 = scmp.le.s32.totalorder 1, %s16
      %p299 = scmp.lt.s32.totalorder %s16, 3
      %p300 = pnand %p298, %p299
      %p301 = pneg %p300
      // Predicated region
      $region53: #{actor_forward.1} parent=5 // pred_check
        _
      $region54: #{actor_forward.1} parent=5 // pred_check_branch
        %303 = sbr.rel (%p300) target = $region56
      $region55: #{actor_forward.1} parent=5 // pred_region
        %s304 = ssub.s32 %s16, 1
        // Predicated region
        $region57: #{actor_forward.1} parent=55 // pred_check
          %p305 = pneg %p147
        $region58: #{actor_forward.1} parent=55 // pred_check_branch
          %307 = sbr.rel (%p305) target = $region60
        $region59: #{actor_forward.1} parent=55 // pred_region
          %308 = dma.done [#allocation3], 1024
        $region60: #{actor_forward.1} parent=55 // pred_fallthru
          _
        %s309 = smul.u32 2, %s21
        %p310 = scmp.lt.s32.totalorder %s309, 3
        %s311 = scalar_select %p310, %s309, 3
        %s312 = smul.addr %s311, 8
        %s313 = scalar_lea.vmem %s0, %s312
        %p314 = pneg %p42
        %p315 = pneg %p39
        %p316 = pneg %p63
        %p317 = pneg %p60
        %p318 = pneg %p84
        %p319 = pneg %p81
        %p320 = pneg %p105
        %p321 = pneg %p102
        %p322 = pneg %p126
        %p323 = pneg %p123
        %p324 = pneg %p147
        %p325 = pneg %p144
        %p326 = pneg %p168
        %p327 = pneg %p165
        %p328 = pneg %p189
        %p329 = pneg %p186
        %p330 = pneg %p210
        %p331 = pneg %p207
        %p332 = pneg %p236
        %p333 = pneg %p233
        %s334 = smul.u32 2, %s21
        %p335 = scmp.lt.s32.totalorder %s334, 3
        %s336 = scalar_select %p335, %s334, 3
        %s337 = smul.addr %s336, 8
        %s338 = scalar_lea.vmem %s9, %s337
        %s339 = smul.u32 2, %s21
        %p340 = scmp.lt.s32.totalorder %s339, 3
        %s341 = scalar_select %p340, %s339, 3
        %s342 = smul.addr %s341, 8
        %s343 = scalar_lea.vmem %s0, %s342
        %s344 = smul.u32 2, %s21
        %s345 = smul.u32 2, %s21
        %p346 = scmp.lt.s32.totalorder %s345, 3
        %s347 = scalar_select %p346, %s345, 3
        %s348 = smul.addr %s347, 8
        %s349 = scalar_lea.vmem %s9, %s348
        %s350 = smul.u32 2, %s21
        %v352 = vld [vmem:[%s343] sm:$0xff]
        %v353 = vld [vmem:[%s343 + $0x8] sm:$0xff]
        %v354 = vld [vmem:[%s1] sm:$0x1]
        %v356 = vlaneseq
        %v357 = vshrl.u32 %v356, 7
        %v358 = vsub.s32 0, %v357
        %v359 = vrot.slane %v354, %v358
        %v361 = vmul.f32 %v352, %v359
        %v362 = vmul.f32 %v353, %v359
        %v363 = vld [vmem:[%s2] sm:$0x1]
        %v365 = vlaneseq
        %v366 = vshrl.u32 %v365, 7
        %v367 = vsub.s32 0, %v366
        %v368 = vrot.slane %v363, %v367
        %v370 = vadd.f32 %v361, %v368
        %v371 = vadd.f32 %v362, %v368
        %v372 = vld [vmem:[%s3] sm:$0xf]
        %v373 = vld [vmem:[%s3 + $0x4] sm:$0xf]
        %v374 = vld [vmem:[%s4] sm:$0x1]
        %v375 = vpack.c.bf16 %v371, %v370
        %v377 = vlaneseq
        %v378 = vshrl.u32 %v377, 7
        %v379 = vsub.s32 0, %v378
        %v380 = vrot.slane %v374, %v379
        %v384 = vunpack.c.l.b16 %v372
        %v385 = vunpack.c.l.b16 %v373
        %v386 = vpack.c.b16 %v385, %v384
        %vm388 = vcmask 130048
        %v390 = vsel %vm388, %v375, 0
        %392 = vmatprep.subr.bf16.mxu0 0
        %393 = vmatpush1.bf16.msra.mxu0 0
        %394 = vmatprep.subr.bf16.mxu0 0
        %395 = vmatpush1.bf16.msra.mxu0 0
        %396 = vmatprep.subr.bf16.mxu0 0
        %397 = vmatpush1.bf16.msra.mxu0 0
        %398 = vmatprep.subr.bf16.mxu0 0
        %399 = vmatpush1.bf16.msra.mxu0 0
        %400 = vmatprep.subr.bf16.mxu0 0
        %401 = vmatpush1.bf16.msra.mxu0 0
        %402 = vmatprep.subr.bf16.mxu0 0
        %403 = vmatpush1.bf16.msra.mxu0 0
        %404 = vmatprep.subr.bf16.mxu0 0
        %405 = vmatpush1.bf16.msra.mxu0 0
        %406 = vmatprep.subr.bf16.mxu0 0
        %407 = vmatpush1.bf16.msra.mxu0 %v386
        %408 = vmatprep.subr.bf16.mxu0 0
        %409 = vmatpush2.bf16.msra.mxu0 0
        %410 = vmatprep.subr.bf16.mxu0 0
        %411 = vmatpush2.bf16.msra.mxu0 0
        %412 = vmatprep.subr.bf16.mxu0 0
        %413 = vmatpush2.bf16.msra.mxu0 0
        %414 = vmatprep.subr.bf16.mxu0 0
        %415 = vmatpush2.bf16.msra.mxu0 0
        %416 = vmatprep.subr.bf16.mxu0 0
        %417 = vmatpush2.bf16.msra.mxu0 0
        %418 = vmatprep.subr.bf16.mxu0 0
        %419 = vmatpush2.bf16.msra.mxu0 0
        %420 = vmatprep.subr.bf16.mxu0 0
        %421 = vmatpush2.bf16.msra.mxu0 0
        %422 = vmatprep.subr.bf16.mxu0 0
        %423 = vmatpush2.bf16.msra.mxu0 0
        %424 = vmatprep.mubr.bf16.mxu0 0
        %425 = vmatmul.mubr.bf16.gmra.mxu0 %v390
        %v426 = vpop.f32.mrf.mxu0
        %v427 = vadd.f32 %v380, %v426
        %v428 = vpop.f32.mrf.mxu0
        %v429 = vpop.f32.mrf.mxu0
        %v430 = vadd.f32 %v380, %v429
        %v431 = vpop.f32.mrf.mxu0
        %432 = vdwg.mxu0
        %v433 = vmax.f32 %v427, 0.0
        %v434 = vmax.f32 %v430, 0.0
        %v435 = vld [vmem:[#allocation2] sm:$0xf]
        %v436 = vld [vmem:[#allocation2 + $0x4] sm:$0xf]
        %v437 = vld [vmem:[#allocation2 + $0x8] sm:$0xf]
        %v438 = vld [vmem:[#allocation2 + $0xc] sm:$0xf]
        %v439 = vld [vmem:[#allocation2 + $0x10] sm:$0xf]
        %v440 = vld [vmem:[#allocation2 + $0x14] sm:$0xf]
        %v441 = vld [vmem:[#allocation2 + $0x18] sm:$0xf]
        %v442 = vld [vmem:[#allocation2 + $0x1c] sm:$0xf]
        %v443 = vld [vmem:[#allocation2 + $0x20] sm:$0xf]
        %v444 = vld [vmem:[#allocation2 + $0x24] sm:$0xf]
        %v445 = vld [vmem:[#allocation2 + $0x28] sm:$0xf]
        %v446 = vld [vmem:[#allocation2 + $0x2c] sm:$0xf]
        %v447 = vld [vmem:[#allocation2 + $0x30] sm:$0xf]
        %v448 = vld [vmem:[#allocation2 + $0x34] sm:$0xf]
        %v449 = vld [vmem:[#allocation2 + $0x38] sm:$0xf]
        %v450 = vld [vmem:[#allocation2 + $0x3c] sm:$0xf]
        %v451 = vld [vmem:[%s6] sm:$0x1]
        %v452 = vpack.c.bf16 %v434, %v433
        %v454 = vlaneseq
        %v455 = vshrl.u32 %v454, 7
        %v456 = vsub.s32 0, %v455
        %v457 = vrot.slane %v451, %v456
        %v475 = vunpack.c.l.b16 %v435
        %v476 = vunpack.c.l.b16 %v436
        %v477 = vunpack.c.l.b16 %v437
        %v478 = vunpack.c.l.b16 %v438
        %v479 = vunpack.c.l.b16 %v439
        %v480 = vunpack.c.l.b16 %v440
        %v481 = vunpack.c.l.b16 %v441
        %v482 = vunpack.c.l.b16 %v442
        %v483 = vunpack.c.l.b16 %v443
        %v484 = vunpack.c.l.b16 %v444
        %v485 = vunpack.c.l.b16 %v445
        %v486 = vunpack.c.l.b16 %v446
        %v487 = vunpack.c.l.b16 %v447
        %v488 = vunpack.c.l.b16 %v448
        %v489 = vunpack.c.l.b16 %v449
        %v490 = vunpack.c.l.b16 %v450
        %v491 = vpack.c.b16 %v476, %v475
        %v492 = vpack.c.b16 %v478, %v477
        %v493 = vpack.c.b16 %v480, %v479
        %v494 = vpack.c.b16 %v482, %v481
        %v495 = vpack.c.b16 %v484, %v483
        %v496 = vpack.c.b16 %v486, %v485
        %v497 = vpack.c.b16 %v488, %v487
        %v498 = vpack.c.b16 %v490, %v489
        %507 = vmatprep.subr.bf16.mxu0 0
        %508 = vmatpush1.bf16.msra.mxu0 %v498
        %509 = vmatprep.subr.bf16.mxu0 0
        %510 = vmatpush1.bf16.msra.mxu0 %v497
        %511 = vmatprep.subr.bf16.mxu0 0
        %512 = vmatpush1.bf16.msra.mxu0 %v496
        %513 = vmatprep.subr.bf16.mxu0 0
        %514 = vmatpush1.bf16.msra.mxu0 %v495
        %515 = vmatprep.subr.bf16.mxu0 0
        %516 = vmatpush1.bf16.msra.mxu0 %v494
        %517 = vmatprep.subr.bf16.mxu0 0
        %518 = vmatpush1.bf16.msra.mxu0 %v493
        %519 = vmatprep.subr.bf16.mxu0 0
        %520 = vmatpush1.bf16.msra.mxu0 %v492
        %521 = vmatprep.subr.bf16.mxu0 0
        %522 = vmatpush1.bf16.msra.mxu0 %v491
        %523 = vmatprep.subr.bf16.mxu0 0
        %524 = vmatpush2.bf16.msra.mxu0 0
        %525 = vmatprep.subr.bf16.mxu0 0
        %526 = vmatpush2.bf16.msra.mxu0 0
        %527 = vmatprep.subr.bf16.mxu0 0
        %528 = vmatpush2.bf16.msra.mxu0 0
        %529 = vmatprep.subr.bf16.mxu0 0
        %530 = vmatpush2.bf16.msra.mxu0 0
        %531 = vmatprep.subr.bf16.mxu0 0
        %532 = vmatpush2.bf16.msra.mxu0 0
        %533 = vmatprep.subr.bf16.mxu0 0
        %534 = vmatpush2.bf16.msra.mxu0 0
        %535 = vmatprep.subr.bf16.mxu0 0
        %536 = vmatpush2.bf16.msra.mxu0 0
        %537 = vmatprep.subr.bf16.mxu0 0
        %538 = vmatpush2.bf16.msra.mxu0 0
        %539 = vmatprep.mubr.bf16.mxu0 0
        %540 = vmatmul.mubr.bf16.gmra.mxu0 %v452
        %v541 = vpop.f32.mrf.mxu0
        %v542 = vadd.f32 %v457, %v541
        %v543 = vpop.f32.mrf.mxu0
        %v544 = vpop.f32.mrf.mxu0
        %v545 = vadd.f32 %v457, %v544
        %v546 = vpop.f32.mrf.mxu0
        %547 = vdwg.mxu0
        %v548 = vmax.f32 %v542, 0.0
        %v549 = vmax.f32 %v545, 0.0
        %v550 = vld [vmem:[%s7] sm:$0xff]
        %v551 = vld [vmem:[%s7 + $0x8] sm:$0xff]
        %v552 = vld [vmem:[%s7 + $0x10] sm:$0xff]
        %v553 = vld [vmem:[%s7 + $0x18] sm:$0xff]
        %v554 = vld [vmem:[%s7 + $0x20] sm:$0xff]
        %v555 = vld [vmem:[%s7 + $0x28] sm:$0xff]
        %v556 = vld [vmem:[%s7 + $0x30] sm:$0xff]
        %v557 = vld [vmem:[%s7 + $0x38] sm:$0xff]
        %v558 = vld [vmem:[%s7 + $0x40] sm:$0xff]
        %v559 = vld [vmem:[%s7 + $0x48] sm:$0xff]
        %v560 = vld [vmem:[%s7 + $0x50] sm:$0xff]
        %v561 = vld [vmem:[%s7 + $0x58] sm:$0xff]
        %v562 = vld [vmem:[%s7 + $0x60] sm:$0xff]
        %v563 = vld [vmem:[%s7 + $0x68] sm:$0xff]
        %v564 = vld [vmem:[%s7 + $0x70] sm:$0xff]
        %v565 = vld [vmem:[%s7 + $0x78] sm:$0xff]
        %v566 = vld [vmem:[%s8] sm:$0x1]
        %v568 = vlaneseq
        %v569 = vshrl.u32 %v568, 7
        %v570 = vsub.s32 0, %v569
        %v571 = vrot.slane %v566, %v570
        %573 = vmatprep.subr.mxu0 0.0
        %574 = vmatpush1.msra.mxu0 %v565
        %575 = vmatprep.subr.mxu0 0.0
        %576 = vmatpush1.msra.mxu0 %v564
        %577 = vmatprep.subr.mxu0 0.0
        %578 = vmatpush1.msra.mxu0 %v563
        %579 = vmatprep.subr.mxu0 0.0
        %580 = vmatpush1.msra.mxu0 %v562
        %581 = vmatprep.subr.mxu0 0.0
        %582 = vmatpush1.msra.mxu0 %v561
        %583 = vmatprep.subr.mxu0 0.0
        %584 = vmatpush1.msra.mxu0 %v560
        %585 = vmatprep.subr.mxu0 0.0
        %586 = vmatpush1.msra.mxu0 %v559
        %587 = vmatprep.subr.mxu0 0.0
        %588 = vmatpush1.msra.mxu0 %v558
        %589 = vmatprep.subr.mxu0 0.0
        %590 = vmatpush1.msra.mxu0 %v557
        %591 = vmatprep.subr.mxu0 0.0
        %592 = vmatpush1.msra.mxu0 %v556
        %593 = vmatprep.subr.mxu0 0.0
        %594 = vmatpush1.msra.mxu0 %v555
        %595 = vmatprep.subr.mxu0 0.0
        %596 = vmatpush1.msra.mxu0 %v554
        %597 = vmatprep.subr.mxu0 0.0
        %598 = vmatpush1.msra.mxu0 %v553
        %599 = vmatprep.subr.mxu0 0.0
        %600 = vmatpush1.msra.mxu0 %v552
        %601 = vmatprep.subr.mxu0 0.0
        %602 = vmatpush1.msra.mxu0 %v551
        %603 = vmatprep.subr.mxu0 0.0
        %604 = vmatpush1.msra.mxu0 %v550
        %605 = vmatprep.subr.mxu0 0.0
        %606 = vmatpush2.msra.mxu0 0.0
        %607 = vmatprep.subr.mxu0 0.0
        %608 = vmatpush2.msra.mxu0 0.0
        %609 = vmatprep.subr.mxu0 0.0
        %610 = vmatpush2.msra.mxu0 0.0
        %611 = vmatprep.subr.mxu0 0.0
        %612 = vmatpush2.msra.mxu0 0.0
        %613 = vmatprep.subr.mxu0 0.0
        %614 = vmatpush2.msra.mxu0 0.0
        %615 = vmatprep.subr.mxu0 0.0
        %616 = vmatpush2.msra.mxu0 0.0
        %617 = vmatprep.subr.mxu0 0.0
        %618 = vmatpush2.msra.mxu0 0.0
        %619 = vmatprep.subr.mxu0 0.0
        %620 = vmatpush2.msra.mxu0 0.0
        %621 = vmatprep.subr.mxu0 0.0
        %622 = vmatpush2.msra.mxu0 0.0
        %623 = vmatprep.subr.mxu0 0.0
        %624 = vmatpush2.msra.mxu0 0.0
        %625 = vmatprep.subr.mxu0 0.0
        %626 = vmatpush2.msra.mxu0 0.0
        %627 = vmatprep.subr.mxu0 0.0
        %628 = vmatpush2.msra.mxu0 0.0
        %629 = vmatprep.subr.mxu0 0.0
        %630 = vmatpush2.msra.mxu0 0.0
        %631 = vmatprep.subr.mxu0 0.0
        %632 = vmatpush2.msra.mxu0 0.0
        %633 = vmatprep.subr.mxu0 0.0
        %634 = vmatpush2.msra.mxu0 0.0
        %635 = vmatprep.subr.mxu0 0.0
        %636 = vmatpush2.msra.mxu0 0.0
        %637 = vmatprep.mubr.f32.mxu0 0.0
        %638 = vmatmul.mubr.f32.gmra.mxu0 %v548
        %v639 = vpop.f32.mrf.mxu0
        %v640 = vadd.f32 %v571, %v639
        %v641 = vpop.f32.mrf.mxu0
        %642 = vmatprep.mubr.f32.mxu0 0.0
        %643 = vmatmul.mubr.f32.gmra.mxu0 %v549
        %v644 = vpop.f32.mrf.mxu0
        %v645 = vadd.f32 %v571, %v644
        %v646 = vpop.f32.mrf.mxu0
        %647 = vdwg.mxu0
        %v648 = vtanh.pop %v640
        %v649 = vtanh.pop %v645
        %650 = vst [vmem:[%s349] sm:$0xff] %v648
        %651 = vst [vmem:[%s349 + $0x8] sm:$0xff] %v649
        %s652 = smul.u32 2, %s21
        %p653 = scmp.lt.s32.totalorder %s652, 3
        %s654 = scalar_select %p653, %s652, 3
        %s655 = smul.addr %s654, 8
        %s656 = scalar_lea.vmem %s9, %s655
        // Predicated region
        $region61: #{actor_forward.1} parent=55 // pred_check
          %p657 = pneg %p233
        $region62: #{actor_forward.1} parent=55 // pred_check_branch
          %659 = sbr.rel (%p657) target = $region64
        $region63: #{actor_forward.1} parent=55 // pred_region
          %s660 = smul.u32 2, %s21
        $region64: #{actor_forward.1} parent=55 // pred_fallthru
          _
      $region56: #{actor_forward.1} parent=5 // pred_fallthru
        _
      %p661 = scmp.le.s32.totalorder 2, %s16
      // Predicated region
      $region65: #{actor_forward.1} parent=5 // pred_check
        %p662 = pneg %p661
      $region66: #{actor_forward.1} parent=5 // pred_check_branch
        %664 = sbr.rel (%p662) target = $region68
      $region67: #{actor_forward.1} parent=5 // pred_region
        %s665 = ssub.s32 %s16, 2
        // Predicated region
        $region69: #{actor_forward.1} parent=67 // pred_check
          %p666 = pneg %p239
        $region70: #{actor_forward.1} parent=67 // pred_check_branch
          %668 = sbr.rel (%p666) target = $region72
        $region71: #{actor_forward.1} parent=67 // pred_region
          %s669 = smul.u32 2, %s22
          %p670 = scmp.lt.s32.totalorder %s669, 3
          %s671 = scalar_select %p670, %s669, 3
          %s672 = smul.addr %s671, 8
          %s673 = scalar_lea.vmem %s9, %s672
        $region72: #{actor_forward.1} parent=67 // pred_fallthru
          _
      $region68: #{actor_forward.1} parent=5 // pred_fallthru
        _
    $region6: #{actor_forward.1} parent=1 // loop_footer
      %s20 = sadd.s32 1, %s16
    $region7: #{actor_forward.1} parent=1 // loop_footer_branch
      %15 = sbr.rel target = $region3
    $region8: #{actor_forward.1} parent=1 // loop_exit
      _
    %674 = vsyncpa [#allocation3], 1
    %s675 = scalar_lea.sflag [#allocation3], 1
    %676 = vsyncpa %s675, 1

</llo_original>
